<compile_context>
chip_gen: v6e
topology: v6e:2x2x1
jax: 0.10.0
libtpu: 0.0.40
codegen_flags: <defaults>
</compile_context>

<pallas_src>
import functools

import jax
import jax.numpy as jnp
from jax.experimental import pallas as pl
from jax.experimental.pallas import tpu as pltpu

_LANES = 128
_CHUNK = 8          # rows (sublanes) processed per inner-loop step
_VMEM_BUDGET = 10 << 20  # double-buffered block budget (fits every chip's default)


def _pick_tile_rows(R, C, logit_itemsize, requested):
    """Largest tile (multiple of 8, or the full extent) within the VMEM budget."""
    # Double-buffered bytes per 128-lane row: logits + int32 labels + f32 CE out.
    bytes_per_row = 2 * _LANES * (C * logit_itemsize + 4 + 4)
    tr = min(requested, max(1, _VMEM_BUDGET // bytes_per_row))
    if tr >= R:
        return R
    return max(8, (tr // 8) * 8)


def _dc_topk_kernel(logits_ref, labels_ref, ce_ref, stats_ref, *,
                    s_valid, tile_rows, needs_mask):
    C = logits_ref.shape[0]

    def process_chunk(r0, nrows, accs, masked):
        """Softmax / CE / dice partial sums for `nrows` rows starting at r0."""
        tp_a, sp_a, cnt_a = accs
        x = logits_ref[:, pl.ds(r0, nrows), :].astype(jnp.float32)  # (C, nrows, 128)
        tgt = labels_ref[pl.ds(r0, nrows), :]                       # (nrows, 128)

        # Softmax over the leading (untiled) class axis: short elementwise
        # loops over dense (nrows, 128) slabs on the VPU/EUP.
        m = jnp.max(x, axis=0)
        e = jnp.exp(x - m[None])
        s = jnp.sum(e, axis=0)
        lse = jnp.log(s) + m                                        # exact, CE path
        probs = e * pl.reciprocal(s, approx=True)[None]             # dice path only

        cls = jax.lax.broadcasted_iota(jnp.int32, (C, nrows, _LANES), 0)
        hit = cls == tgt[None]                                      # (C, nrows, 128)

        # Per-voxel CE = logsumexp - logit[target]. Tail/pad voxels may hold
        # garbage but the wrapper slices them off before top-k -> no mask here.
        gathered = jnp.sum(jnp.where(hit, x, 0.0), axis=0)
        ce_ref[pl.ds(r0, nrows), :] = lse - gathered

        if masked:
            ridx = jax.lax.broadcasted_iota(jnp.int32, (nrows, _LANES), 0)
            lidx = jax.lax.broadcasted_iota(jnp.int32, (nrows, _LANES), 1)
            row0 = pl.program_id(1) * tile_rows + r0
            valid = (row0 + ridx) * _LANES + lidx < s_valid
            hit = jnp.logical_and(hit, valid[None])
            probs = jnp.where(valid[None], probs, 0.0)

        # Select-based accumulation: no float one-hot / masked-prob temporaries.
        tp_a = tp_a + jnp.where(hit, probs, 0.0)   # p * onehot
        sp_a = sp_a + probs                        # sum(p)
        cnt_a = cnt_a + hit.astype(jnp.float32)    # sum(onehot)
        return tp_a, sp_a, cnt_a

    def run(masked):
        n_full = tile_rows // _CHUNK
        tail = tile_rows - n_full * _CHUNK

        tp_l = jnp.zeros((C, _LANES), jnp.float32)
        sp_l = jnp.zeros((C, _LANES), jnp.float32)
        cnt_l = jnp.zeros((C, _LANES), jnp.float32)

        if n_full:
            zero = jnp.zeros((C, _CHUNK, _LANES), jnp.float32)

            def body(ci, accs):
                r0 = pl.multiple_of(ci * _CHUNK, _CHUNK)
                return process_chunk(r0, _CHUNK, accs, masked)

            tp_a, sp_a, cnt_a = jax.lax.fori_loop(0, n_full, body,
                                                  (zero, zero, zero))
            tp_l += jnp.sum(tp_a, axis=1)
            sp_l += jnp.sum(sp_a, axis=1)
            cnt_l += jnp.sum(cnt_a, axis=1)

        if tail:
            zt = jnp.zeros((C, tail, _LANES), jnp.float32)
            tp_a, sp_a, cnt_a = process_chunk(n_full * _CHUNK, tail,
                                              (zt, zt, zt), masked)
            tp_l += jnp.sum(tp_a, axis=1)
            sp_l += jnp.sum(sp_a, axis=1)
            cnt_l += jnp.sum(cnt_a, axis=1)

        # One lane-dense stats write per tile (no cross-grid RMW).
        stats_ref[0] = tp_l
        stats_ref[1] = sp_l
        stats_ref[2] = cnt_l

    if not needs_mask:
        run(masked=False)
    else:
        last = pl.num_programs(1) - 1

        @pl.when(pl.program_id(1) != last)
        def _():
            run(masked=False)

        @pl.when(pl.program_id(1) == last)
        def _():
            run(masked=True)


def dc_and_topk_loss(net_output, target, *, weight_ce=1.0, weight_dice=1.0,
                     k=10.0, smooth=1e-5, do_bg=False, tile_rows=512):
    """net_output: (B, C, H, W) logits (f32 or bf16); target: (B, 1, H, W) ints."""
    B, C, H, W = net_output.shape
    S = H * W

    # Free reshapes of the native NCHW layout; logits keep their HBM dtype
    # (bf16 models stream bf16) and are widened in-register inside the kernel.
    logits = net_output.reshape(B, C, S)
    labels = target[:, 0].reshape(B, S).astype(jnp.int32)
    # TODO(synk): store labels as int8 (C < 128) to shave label HBM traffic.

    # Pad the spatial axis to a lane multiple only when H*W is not already one
    # (typical nnU-Net patches need no pad).
    # TODO(synk): for odd H*W, fold the pad into the in-kernel valid mask
    # instead of materializing a padded copy of the logits.
    s_pad = (-S) % _LANES
    if s_pad:
        logits = jnp.pad(logits, ((0, 0), (0, 0), (0, s_pad)))
        labels = jnp.pad(labels, ((0, 0), (0, s_pad)))
    R = (S + s_pad) // _LANES
    logits = logits.reshape(B, C, R, _LANES)
    labels = labels.reshape(B, R, _LANES)

    tr = _pick_tile_rows(R, C, net_output.dtype.itemsize, tile_rows)
    n_tiles = pl.cdiv(R, tr)
    # Invalid voxels (lane pad / ragged last grid tile) exist only when the
    # grid coverage exceeds the true voxel count, and only in the last tile.
    needs_mask = n_tiles * tr * _LANES > S

    kernel = functools.partial(_dc_topk_kernel, s_valid=S, tile_rows=tr,
                               needs_mask=needs_mask)

    ce_map, stats = pl.pallas_call(
        kernel,
        out_shape=(
            jax.ShapeDtypeStruct((B, R, _LANES), jnp.float32),             # per-voxel CE
            jax.ShapeDtypeStruct((B, n_tiles, 3, C, _LANES), jnp.float32),  # tp / sum(p) / count
        ),
        grid_spec=pltpu.PrefetchScalarGridSpec(
            num_scalar_prefetch=0,
            grid=(B, n_tiles),
            in_specs=[
                pl.BlockSpec((None, C, tr, _LANES), lambda b, i: (b, 0, i, 0)),
                pl.BlockSpec((None, tr, _LANES), lambda b, i: (b, i, 0)),
            ],
            out_specs=[
                pl.BlockSpec((None, tr, _LANES), lambda b, i: (b, i, 0)),
                pl.BlockSpec((None, None, 3, C, _LANES),
                             lambda b, i: (b, i, 0, 0, 0)),
            ],
        ),
        compiler_params=pltpu.CompilerParams(
            dimension_semantics=("parallel", "parallel")),
    )(logits, labels)

    # --- Soft Dice (batch_dice=True): reduce per-(batch, tile, class, lane) stats ---
    st = jnp.sum(stats, axis=(0, 1, 4))          # (3, C)
    tp = st[0]
    fp = st[1] - tp                              # sum(p)      - tp
    fn = st[2] - tp                              # sum(onehot) - tp
    dc = (2.0 * tp + smooth) / jnp.clip(2.0 * tp + fp + fn + smooth, 1e-8)
    if not do_bg:
        dc = dc[1:]
    dc_loss = -jnp.mean(dc)

    # --- TopK cross entropy: top k% of per-voxel CE values ---
    # TODO(synk): for multi-million-voxel inputs, replace lax.top_k with an
    # in-kernel CE histogram + threshold (or hierarchical top-k) to avoid the
    # O(N log N) sort and the full-f32 CE round trip through HBM.
    ce_flat = ce_map.reshape(B, R * _LANES)[:, :S].reshape(-1)
    n_topk = max(1, int(B * S * k / 100))
    ce_loss = jnp.mean(jax.lax.top_k(ce_flat, n_topk)[0])

    return weight_ce * ce_loss + weight_dice * dc_loss


def _reference(net_output, target, *, weight_ce=1.0, weight_dice=1.0,
               k=10.0, smooth=1e-5, do_bg=False):
    """Pure-JAX reference mirroring the PyTorch module."""
    B, C, H, W = net_output.shape
    x = jax.nn.softmax(net_output.astype(jnp.float32), axis=1)
    y = jax.nn.one_hot(target[:, 0], C, axis=1, dtype=jnp.float32)
    axes = (0, 2, 3)  # batch_dice=True
    tp = jnp.sum(x * y, axes)
    fp = jnp.sum(x * (1.0 - y), axes)
    fn = jnp.sum((1.0 - x) * y, axes)
    dc = (2.0 * tp + smooth) / jnp.clip(2.0 * tp + fp + fn + smooth, 1e-8)
    if not do_bg:
        dc = dc[1:]
    dc_loss = -jnp.mean(dc)

    logp = jax.nn.log_softmax(net_output.astype(jnp.float32), axis=1)
    ce = -jnp.take_along_axis(logp, target.astype(jnp.int32), axis=1)[:, 0]
    ce_flat = ce.reshape(-1)
    n_topk = max(1, int(ce_flat.size * k / 100))
    ce_loss = jnp.mean(jax.lax.top_k(ce_flat, n_topk)[0])
    return weight_ce * ce_loss + weight_dice * dc_loss


if __name__ == "__main__":
    key = jax.random.PRNGKey(0)
    k1, k2 = jax.random.split(key)
    B, C, H, W = 2, 4, 16, 16
    net_output = jax.random.normal(k1, (B, C, H, W), jnp.float32)
    target = jax.random.randint(k2, (B, 1, H, W), 0, C, jnp.int32)

    loss = dc_and_topk_loss(net_output, target)
    loss = jax.block_until_ready(loss)

    ref = _reference(net_output, target)
    assert jnp.allclose(loss, ref, rtol=1e-3, atol=1e-5), (loss, ref)
    print("KERNEL_OK")
</pallas_src>

<mosaic_0001>
module attributes {stable_mosaic.version = 11 : i64} {
  func.func @_dc_topk_kernel(%arg0: i32, %arg1: i32, %arg2: memref<1x4x2x128xf32, #tpu.memory_space<vmem>>, %arg3: memref<1x2x128xi32, #tpu.memory_space<vmem>>, %arg4: memref<1x2x128xf32, #tpu.memory_space<vmem>>, %arg5: memref<1x1x3x4x128xf32, #tpu.memory_space<vmem>>) attributes {dimension_semantics = [#tpu.dimension_semantics<parallel>, #tpu.dimension_semantics<parallel>], iteration_bounds = array<i64: 2, 1>, scalar_prefetch = 0 : i64, scratch_operands = 0 : i64, tpu.core_type = #tpu.core_type<tc>, window_params = [{transform_indices = @transform_0, window_bounds = array<i64: 1, 4, 2, 128>}, {transform_indices = @transform_1, window_bounds = array<i64: 1, 2, 128>}, {transform_indices = @transform_2, window_bounds = array<i64: 1, 2, 128>}, {transform_indices = @transform_3, window_bounds = array<i64: 1, 1, 3, 4, 128>}]} {
    %cst = arith.constant 0.000000e+00 : f32
    %0 = vector.broadcast %cst : f32 to vector<4x128xf32>
    %cst_0 = arith.constant 0.000000e+00 : f32
    %1 = vector.broadcast %cst_0 : f32 to vector<4x128xf32>
    %cst_1 = arith.constant 0.000000e+00 : f32
    %2 = vector.broadcast %cst_1 : f32 to vector<4x128xf32>
    %cst_2 = arith.constant 0.000000e+00 : f32
    %3 = vector.broadcast %cst_2 : f32 to vector<4x2x128xf32>
    %c0 = arith.constant 0 : index
    %c0_3 = arith.constant 0 : index
    %c0_4 = arith.constant 0 : index
    %c0_5 = arith.constant 0 : index
    %4 = vector.load %arg2[%c0, %c0_3, %c0_4, %c0_5] : memref<1x4x2x128xf32, #tpu.memory_space<vmem>>, vector<1x4x2x128xf32>
    %5 = vector.shape_cast %4 : vector<1x4x2x128xf32> to vector<4x2x128xf32>
    %c0_6 = arith.constant 0 : index
    %c0_7 = arith.constant 0 : index
    %c0_8 = arith.constant 0 : index
    %6 = vector.load %arg3[%c0_6, %c0_7, %c0_8] : memref<1x2x128xi32, #tpu.memory_space<vmem>>, vector<1x2x128xi32>
    %7 = vector.shape_cast %6 : vector<1x2x128xi32> to vector<2x128xi32>
    %cst_9 = arith.constant dense<0xFF800000> : vector<2x128xf32>
    %8 = vector.multi_reduction <maximumf>, %5, %cst_9 [0] : vector<4x2x128xf32> to vector<2x128xf32>
    %9 = vector.shape_cast %8 : vector<2x128xf32> to vector<1x2x128xf32>
    %10 = vector.broadcast %9 : vector<1x2x128xf32> to vector<4x2x128xf32>
    %11 = arith.subf %5, %10 : vector<4x2x128xf32>
    %12 = math.exp %11 : vector<4x2x128xf32>
    %cst_10 = arith.constant dense<0.000000e+00> : vector<2x128xf32>
    %13 = vector.multi_reduction <add>, %12, %cst_10 [0] : vector<4x2x128xf32> to vector<2x128xf32>
    %14 = math.log %13 : vector<2x128xf32>
    %15 = arith.addf %14, %8 : vector<2x128xf32>
    %16 = tpu.reciprocal %13 {approx = true} : vector<2x128xf32> -> vector<2x128xf32>
    %17 = vector.shape_cast %16 : vector<2x128xf32> to vector<1x2x128xf32>
    %18 = vector.broadcast %17 : vector<1x2x128xf32> to vector<4x2x128xf32>
    %19 = arith.mulf %12, %18 : vector<4x2x128xf32>
    %20 = tpu.iota {dimensions = array<i32: 0>} : vector<4x2x128xi32>
    %21 = vector.shape_cast %7 : vector<2x128xi32> to vector<1x2x128xi32>
    %22 = vector.broadcast %21 : vector<1x2x128xi32> to vector<4x2x128xi32>
    %23 = arith.cmpi eq, %20, %22 : vector<4x2x128xi32>
    %cst_11 = arith.constant 0.000000e+00 : f32
    %24 = vector.broadcast %cst_11 : f32 to vector<4x2x128xf32>
    %25 = arith.select %23, %5, %24 : vector<4x2x128xi1>, vector<4x2x128xf32>
    %cst_12 = arith.constant dense<0.000000e+00> : vector<2x128xf32>
    %26 = vector.multi_reduction <add>, %25, %cst_12 [0] : vector<4x2x128xf32> to vector<2x128xf32>
    %27 = arith.subf %15, %26 : vector<2x128xf32>
    %c0_13 = arith.constant 0 : index
    %c0_14 = arith.constant 0 : index
    %c0_15 = arith.constant 0 : index
    %28 = vector.load %arg4[%c0_13, %c0_14, %c0_15] : memref<1x2x128xf32, #tpu.memory_space<vmem>>, vector<1x2x128xf32>
    %29 = vector.shape_cast %28 : vector<1x2x128xf32> to vector<2x128xf32>
    %30 = vector.shape_cast %27 : vector<2x128xf32> to vector<1x2x128xf32>
    tpu.vector_store %arg4[%c0_13, %c0_14, %c0_15], %30 {strides = array<i32>} : memref<1x2x128xf32, #tpu.memory_space<vmem>>, vector<1x2x128xf32>,
    %cst_16 = arith.constant 0.000000e+00 : f32
    %31 = vector.broadcast %cst_16 : f32 to vector<4x2x128xf32>
    %32 = arith.select %23, %19, %31 : vector<4x2x128xi1>, vector<4x2x128xf32>
    %33 = arith.addf %3, %32 : vector<4x2x128xf32>
    %34 = arith.addf %3, %19 : vector<4x2x128xf32>
    %35 = arith.extui %23 : vector<4x2x128xi1> to vector<4x2x128xi32>
    %36 = arith.sitofp %35 : vector<4x2x128xi32> to vector<4x2x128xf32>
    %37 = arith.addf %3, %36 : vector<4x2x128xf32>
    %cst_17 = arith.constant dense<0.000000e+00> : vector<4x128xf32>
    %38 = vector.multi_reduction <add>, %33, %cst_17 [1] : vector<4x2x128xf32> to vector<4x128xf32>
    %39 = arith.addf %0, %38 : vector<4x128xf32>
    %cst_18 = arith.constant dense<0.000000e+00> : vector<4x128xf32>
    %40 = vector.multi_reduction <add>, %34, %cst_18 [1] : vector<4x2x128xf32> to vector<4x128xf32>
    %41 = arith.addf %1, %40 : vector<4x128xf32>
    %cst_19 = arith.constant dense<0.000000e+00> : vector<4x128xf32>
    %42 = vector.multi_reduction <add>, %37, %cst_19 [1] : vector<4x2x128xf32> to vector<4x128xf32>
    %43 = arith.addf %2, %42 : vector<4x128xf32>
    %c0_20 = arith.constant 0 : index
    %c0_21 = arith.constant 0 : index
    %c0_22 = arith.constant 0 : index
    %c0_23 = arith.constant 0 : index
    %c0_24 = arith.constant 0 : index
    %44 = vector.load %arg5[%c0_20, %c0_21, %c0_22, %c0_23, %c0_24] : memref<1x1x3x4x128xf32, #tpu.memory_space<vmem>>, vector<1x1x1x4x128xf32>
    %45 = vector.shape_cast %44 : vector<1x1x1x4x128xf32> to vector<4x128xf32>
    %46 = vector.shape_cast %39 : vector<4x128xf32> to vector<1x1x1x4x128xf32>
    tpu.vector_store %arg5[%c0_20, %c0_21, %c0_22, %c0_23, %c0_24], %46 {strides = array<i32>} : memref<1x1x3x4x128xf32, #tpu.memory_space<vmem>>, vector<1x1x1x4x128xf32>,
    %c0_25 = arith.constant 0 : index
    %c0_26 = arith.constant 0 : index
    %c1 = arith.constant 1 : index
    %c0_27 = arith.constant 0 : index
    %c0_28 = arith.constant 0 : index
    %47 = vector.load %arg5[%c0_25, %c0_26, %c1, %c0_27, %c0_28] : memref<1x1x3x4x128xf32, #tpu.memory_space<vmem>>, vector<1x1x1x4x128xf32>
    %48 = vector.shape_cast %47 : vector<1x1x1x4x128xf32> to vector<4x128xf32>
    %49 = vector.shape_cast %41 : vector<4x128xf32> to vector<1x1x1x4x128xf32>
    tpu.vector_store %arg5[%c0_25, %c0_26, %c1, %c0_27, %c0_28], %49 {strides = array<i32>} : memref<1x1x3x4x128xf32, #tpu.memory_space<vmem>>, vector<1x1x1x4x128xf32>,
    %c0_29 = arith.constant 0 : index
    %c0_30 = arith.constant 0 : index
    %c2 = arith.constant 2 : index
    %c0_31 = arith.constant 0 : index
    %c0_32 = arith.constant 0 : index
    %50 = vector.load %arg5[%c0_29, %c0_30, %c2, %c0_31, %c0_32] : memref<1x1x3x4x128xf32, #tpu.memory_space<vmem>>, vector<1x1x1x4x128xf32>
    %51 = vector.shape_cast %50 : vector<1x1x1x4x128xf32> to vector<4x128xf32>
    %52 = vector.shape_cast %43 : vector<4x128xf32> to vector<1x1x1x4x128xf32>
    tpu.vector_store %arg5[%c0_29, %c0_30, %c2, %c0_31, %c0_32], %52 {strides = array<i32>} : memref<1x1x3x4x128xf32, #tpu.memory_space<vmem>>, vector<1x1x1x4x128xf32>,
    return
  }
  func.func @transform_0(%arg0: i32, %arg1: i32) -> (i32, i32, i32, i32) {
    %c0_i32 = arith.constant 0 : i32
    %c0_i32_0 = arith.constant 0 : i32
    %c0_i32_1 = arith.constant 0 : i32
    return %arg0, %c0_i32, %arg1, %c0_i32_0 : i32, i32, i32, i32
  }
  func.func @transform_1(%arg0: i32, %arg1: i32) -> (i32, i32, i32) {
    %c0_i32 = arith.constant 0 : i32
    %c0_i32_0 = arith.constant 0 : i32
    return %arg0, %arg1, %c0_i32 : i32, i32, i32
  }
  func.func @transform_2(%arg0: i32, %arg1: i32) -> (i32, i32, i32) {
    %c0_i32 = arith.constant 0 : i32
    %c0_i32_0 = arith.constant 0 : i32
    return %arg0, %arg1, %c0_i32 : i32, i32, i32
  }
  func.func @transform_3(%arg0: i32, %arg1: i32) -> (i32, i32, i32, i32, i32) {
    %c0_i32 = arith.constant 0 : i32
    %c0_i32_0 = arith.constant 0 : i32
    %c0_i32_1 = arith.constant 0 : i32
    %c0_i32_2 = arith.constant 0 : i32
    return %arg0, %arg1, %c0_i32, %c0_i32_0, %c0_i32_1 : i32, i32, i32, i32, i32
  }
}

</mosaic_0001>

<llo_original>
// kernel: tpu_custom_call.1
$region0: #{tpu_custom_call.1}
  #allocation0 [shape = 'u32[]', space=smem, size = 0x4, offset = 0x4, fixed_abs, tag = 'smem constant byte address 0x4 - core index']
  #allocation1 [shape = 'u32[144,128]{1,0:T(1,128)}', space=vmem, size = 0x12000, scoped, tag = 'internal scratch']
  %s0 = inlined_call_operand.hbm [shape: f32[2,4,2,128], index: 0, kind: input, shape index: {}]
  %s1 = inlined_call_operand.hbm [shape: s32[2,2,128], index: 1, kind: input, shape index: {}]
  %s2 = inlined_call_operand.hbm [shape: f32[2,2,128], index: 2, kind: output, shape index: {0}]
  %s3 = inlined_call_operand.hbm [shape: f32[2,1,3,4,128], index: 3, kind: output, shape index: {1}]
  %4 = xla_tuple %s2, %s3
  %s5 = sld [smem:[#allocation0]]
  $region57: #{tpu_custom_call.1} parent=0
    _
  %s7 = ssub.s32 1, %s5
  %s8 = scalar_select 0, %s7, %s5
  $region1: #{tpu_custom_call.1} parent=0
    #allocation2 [shape = 'u8[8192]{0}', space=vmem, size = 0x2000, scoped, tag = 'input window, operand 0']
    #allocation3 [shape = 's32[2]{0}', space=sflag, size = 0x8, scoped, tag = 'scoped memory for tpu_custom_call.1']
    #allocation4 [shape = 's32[2]{0}', space=sflag, size = 0x8, scoped, tag = 'scoped memory for tpu_custom_call.1']
    #allocation5 [shape = 'u8[2048]{0}', space=vmem, size = 0x800, scoped, tag = 'input window, operand 1']
    #allocation6 [shape = 's32[2]{0}', space=sflag, size = 0x8, scoped, tag = 'scoped memory for tpu_custom_call.1']
    #allocation7 [shape = 'u8[2048]{0}', space=vmem, size = 0x800, scoped, tag = 'output window, operand 0']
    #allocation8 [shape = 'u8[12288]{0}', space=vmem, size = 0x3000, scoped, tag = 'output window, operand 1']
    #allocation9 [shape = 's32[2]{0}', space=sflag, size = 0x8, scoped, tag = 'scoped memory for tpu_custom_call.1']
    %9 = vsyncpa [#allocation3], 0
    %s10 = scalar_lea.sflag [#allocation3], 1
    %11 = vsyncpa %s10, 0
    %12 = vsyncpa [#allocation6], 0
    %s13 = scalar_lea.sflag [#allocation6], 1
    %14 = vsyncpa %s13, 0
    %15 = vsyncpa [#allocation4], 0
    %s16 = scalar_lea.sflag [#allocation4], 1
    %17 = vsyncpa %s16, 0
    %18 = vsyncpa [#allocation9], 0
    %s19 = scalar_lea.sflag [#allocation9], 1
    %20 = vsyncpa %s19, 0
    loop: start=0, step=1, limit=4
    $region2: #{tpu_custom_call.1} parent=1 // loop_pre_header
      _
    $region3: #{tpu_custom_call.1} parent=1 // loop_header
      %s22 = sphi 0, %s26
      %p23 = scmp.ge.s32.totalorder %s22, 4
      %s29 = sphi 0, %s41
      %s30 = sphi 0, %s37
      %s31 = sphi 0, %s29
      %s32 = sphi 0, %s30
      %s33 = sphi 0, %s31
      %s34 = sphi 0, %s32
      %s46 = sphi 0, %s48
      %s49 = sphi 0, %s46
      %s50 = sphi 0, %s49
      %s66 = sphi 0, %s50
      %s74 = sphi 0, %s76
      %s77 = sphi 0, %s74
      %s78 = sphi 0, %s77
      %s94 = sphi 0, %s78
      %s102 = sphi 0, %s104
      %s105 = sphi 0, %s102
      %s106 = sphi 0, %s105
      %s122 = sphi 0, %s106
      %s130 = sphi 0, %s132
      %s133 = sphi 0, %s130
      %s134 = sphi 0, %s133
      %s150 = sphi 0, %s134
    $region4: #{tpu_custom_call.1} parent=1 // loop_header_branch
      %25 = sbr.rel (%p23) target = $region8
    $region5: #{tpu_custom_call.1} parent=1 // loop_body
      %s27 = ssub.s32 %s22, 1
      %s28 = ssub.s32 %s22, 2
      %s35 = sadd.s32 1, %s30
      %p36 = scmp.ge.s32.totalorder %s35, 1
      %s37 = scalar_select %p36, 0, %s35
      %s38 = sadd.s32 1, %s29
      %s39 = scalar_select %p36, %s38, %s29
      %p40 = scmp.ge.s32.totalorder %s39, 2
      %s41 = scalar_select %p40, 0, %s39
      %s42 = ssub.s32 %s29, %s41
      %s43 = ssub.s32 %s30, %s37
      %s44 = sor.u32 %s42, %s43
      %p45 = scmp.eq.s32.totalorder %s44, 0
      %s47 = sadd.s32 %s46, 1
      %s48 = scalar_select %p45, %s46, %s47
      %p51 = pneg %p45
      %p52 = scmp.eq.s32.totalorder %s22, 1
      %p53 = por %p51, %p52
      %p54 = scmp.ne.s32.totalorder %s46, %s49
      %p55 = scmp.eq.s32.totalorder %s22, 0
      %p56 = por %p54, %p55
      %p57 = scmp.ne.s32.totalorder %s46, %s49
      %p58 = scmp.eq.s32.totalorder %s27, 1
      %p59 = por %p57, %p58
      %p60 = scmp.ne.s32.totalorder %s49, %s50
      %p61 = scmp.eq.s32.totalorder %s27, 0
      %p62 = por %p60, %p61
      %p63 = scmp.ne.s32.totalorder %s49, %s50
      %p64 = scmp.eq.s32.totalorder %s28, 1
      %p65 = por %p63, %p64
      %p67 = scmp.ne.s32.totalorder %s50, %s66
      %p68 = scmp.eq.s32.totalorder %s28, 0
      %p69 = por %p67, %p68
      %s70 = ssub.s32 %s29, %s41
      %s71 = ssub.s32 %s30, %s37
      %s72 = sor.u32 %s70, %s71
      %p73 = scmp.eq.s32.totalorder %s72, 0
      %s75 = sadd.s32 %s74, 1
      %s76 = scalar_select %p73, %s74, %s75
      %p79 = pneg %p73
      %p80 = scmp.eq.s32.totalorder %s22, 1
      %p81 = por %p79, %p80
      %p82 = scmp.ne.s32.totalorder %s74, %s77
      %p83 = scmp.eq.s32.totalorder %s22, 0
      %p84 = por %p82, %p83
      %p85 = scmp.ne.s32.totalorder %s74, %s77
      %p86 = scmp.eq.s32.totalorder %s27, 1
      %p87 = por %p85, %p86
      %p88 = scmp.ne.s32.totalorder %s77, %s78
      %p89 = scmp.eq.s32.totalorder %s27, 0
      %p90 = por %p88, %p89
      %p91 = scmp.ne.s32.totalorder %s77, %s78
      %p92 = scmp.eq.s32.totalorder %s28, 1
      %p93 = por %p91, %p92
      %p95 = scmp.ne.s32.totalorder %s78, %s94
      %p96 = scmp.eq.s32.totalorder %s28, 0
      %p97 = por %p95, %p96
      %s98 = ssub.s32 %s29, %s41
      %s99 = ssub.s32 %s30, %s37
      %s100 = sor.u32 %s98, %s99
      %p101 = scmp.eq.s32.totalorder %s100, 0
      %s103 = sadd.s32 %s102, 1
      %s104 = scalar_select %p101, %s102, %s103
      %p107 = pneg %p101
      %p108 = scmp.eq.s32.totalorder %s22, 1
      %p109 = por %p107, %p108
      %p110 = scmp.ne.s32.totalorder %s102, %s105
      %p111 = scmp.eq.s32.totalorder %s22, 0
      %p112 = por %p110, %p111
      %p113 = scmp.ne.s32.totalorder %s102, %s105
      %p114 = scmp.eq.s32.totalorder %s27, 1
      %p115 = por %p113, %p114
      %p116 = scmp.ne.s32.totalorder %s105, %s106
      %p117 = scmp.eq.s32.totalorder %s27, 0
      %p118 = por %p116, %p117
      %p119 = scmp.ne.s32.totalorder %s105, %s106
      %p120 = scmp.eq.s32.totalorder %s28, 1
      %p121 = por %p119, %p120
      %p123 = scmp.ne.s32.totalorder %s106, %s122
      %p124 = scmp.eq.s32.totalorder %s28, 0
      %p125 = por %p123, %p124
      %s126 = ssub.s32 %s29, %s41
      %s127 = ssub.s32 %s30, %s37
      %s128 = sor.u32 %s126, %s127
      %p129 = scmp.eq.s32.totalorder %s128, 0
      %s131 = sadd.s32 %s130, 1
      %s132 = scalar_select %p129, %s130, %s131
      %p135 = pneg %p129
      %p136 = scmp.eq.s32.totalorder %s22, 1
      %p137 = por %p135, %p136
      %p138 = scmp.ne.s32.totalorder %s130, %s133
      %p139 = scmp.eq.s32.totalorder %s22, 0
      %p140 = por %p138, %p139
      %p141 = scmp.ne.s32.totalorder %s130, %s133
      %p142 = scmp.eq.s32.totalorder %s27, 1
      %p143 = por %p141, %p142
      %p144 = scmp.ne.s32.totalorder %s133, %s134
      %p145 = scmp.eq.s32.totalorder %s27, 0
      %p146 = por %p144, %p145
      %p147 = scmp.ne.s32.totalorder %s133, %s134
      %p148 = scmp.eq.s32.totalorder %s28, 1
      %p149 = por %p147, %p148
      %p151 = scmp.ne.s32.totalorder %s134, %s150
      %p152 = scmp.eq.s32.totalorder %s28, 0
      %p153 = por %p151, %p152
      %p154 = scmp.le.s32.totalorder 1, %s22
      %p155 = scmp.lt.s32.totalorder %s22, 3
      %p156 = pnand %p154, %p155
      %p157 = pneg %p156
      // Predicated region
      $region9: #{tpu_custom_call.1} parent=5 // pred_check
        _
      $region10: #{tpu_custom_call.1} parent=5 // pred_check_branch
        %159 = sbr.rel (%p156) target = $region12
      $region11: #{tpu_custom_call.1} parent=5 // pred_region
        %s160 = ssub.s32 %s22, 1
      $region12: #{tpu_custom_call.1} parent=5 // pred_fallthru
        _
      %p161 = scmp.lt.s32.totalorder %s22, 2
      // Predicated region
      $region13: #{tpu_custom_call.1} parent=5 // pred_check
        %p162 = pneg %p161
      $region14: #{tpu_custom_call.1} parent=5 // pred_check_branch
        %164 = sbr.rel (%p162) target = $region16
      $region15: #{tpu_custom_call.1} parent=5 // pred_region
        // Predicated region
        $region17: #{tpu_custom_call.1} parent=15 // pred_check
          %p165 = pneg %p56
        $region18: #{tpu_custom_call.1} parent=15 // pred_check_branch
          %167 = sbr.rel (%p165) target = $region20
        $region19: #{tpu_custom_call.1} parent=15 // pred_region
          %s168 = sand.u32 %s46, 1
          %s169 = scalar_lea.sflag [#allocation3], %s168
          %s170 = sand.u32 %s46, 1
          %s171 = smul.addr %s170, 8
          %s172 = scalar_lea.vmem [#allocation2], %s171
          %s174 = ssub.s32 128, 128
          %175 = vsyncadd %s169, %s174
          %s176 = smul.addr %s29, 4
          %s177 = sadd.s32 %s30, %s176
          %s178 = smul.addr %s177, 32
          %s179 = scalar_lea.hbm %s0, %s178
          %s180 = sshll.u32 %s172, 4
          %s181 = int_to_ptr.vmem [resolvable:$true] %s180
          %186 = dma.hbm_to_vmem [thread:$0]  %s179, 128, %s181, %s169, 32, 32, 2
        $region20: #{tpu_custom_call.1} parent=15 // pred_fallthru
          _
        // Predicated region
        $region21: #{tpu_custom_call.1} parent=15 // pred_check
          %p187 = pneg %p84
        $region22: #{tpu_custom_call.1} parent=15 // pred_check_branch
          %189 = sbr.rel (%p187) target = $region24
        $region23: #{tpu_custom_call.1} parent=15 // pred_region
          %s190 = sand.u32 %s74, 1
          %s191 = scalar_lea.sflag [#allocation6], %s190
          %s192 = sand.u32 %s74, 1
          %s193 = smul.addr %s192, 2
          %s194 = scalar_lea.vmem [#allocation5], %s193
          %s196 = ssub.s32 32, 32
          %197 = vsyncadd %s191, %s196
          %s198 = sadd.s32 %s30, %s29
          %s199 = smul.addr %s198, 32
          %s200 = scalar_lea.hbm %s1, %s199
          %s202 = sshll.u32 %s194, 4
          %s203 = int_to_ptr.vmem [resolvable:$true] %s202
          %205 = dma.hbm_to_vmem [thread:$0]  %s200, 32, %s203, %s191
        $region24: #{tpu_custom_call.1} parent=15 // pred_fallthru
          _
      $region16: #{tpu_custom_call.1} parent=5 // pred_fallthru
        _
      %p206 = scmp.le.s32.totalorder 1, %s22
      %p207 = scmp.lt.s32.totalorder %s22, 3
      %p208 = pnand %p206, %p207
      %p209 = pneg %p208
      // Predicated region
      $region25: #{tpu_custom_call.1} parent=5 // pred_check
        _
      $region26: #{tpu_custom_call.1} parent=5 // pred_check_branch
        %211 = sbr.rel (%p208) target = $region28
      $region27: #{tpu_custom_call.1} parent=5 // pred_region
        %s212 = ssub.s32 %s22, 1
        %s213 = sand.u32 %s49, 1
        %s214 = scalar_lea.sflag [#allocation3], %s213
        %s215 = sand.u32 %s49, 1
        %s216 = smul.addr %s215, 8
        %s217 = scalar_lea.vmem [#allocation2], %s216
        // Predicated region
        $region29: #{tpu_custom_call.1} parent=27 // pred_check
          %p218 = pneg %p62
        $region30: #{tpu_custom_call.1} parent=27 // pred_check_branch
          %220 = sbr.rel (%p218) target = $region32
        $region31: #{tpu_custom_call.1} parent=27 // pred_region
          %221 = dma.done %s214, 128
        $region32: #{tpu_custom_call.1} parent=27 // pred_fallthru
          _
        %s222 = sand.u32 %s77, 1
        %s223 = scalar_lea.sflag [#allocation6], %s222
        %s224 = sand.u32 %s77, 1
        %s225 = smul.addr %s224, 2
        %s226 = scalar_lea.vmem [#allocation5], %s225
        // Predicated region
        $region33: #{tpu_custom_call.1} parent=27 // pred_check
          %p227 = pneg %p90
        $region34: #{tpu_custom_call.1} parent=27 // pred_check_branch
          %229 = sbr.rel (%p227) target = $region36
        $region35: #{tpu_custom_call.1} parent=27 // pred_region
          %230 = dma.done %s223, 32
        $region36: #{tpu_custom_call.1} parent=27 // pred_fallthru
          _
        %s231 = sand.u32 %s49, 1
        %s232 = scalar_lea.sflag [#allocation3], %s231
        %s233 = sand.u32 %s49, 1
        %s234 = smul.addr %s233, 8
        %s235 = scalar_lea.vmem [#allocation2], %s234
        %p236 = pneg %p62
        %p237 = pneg %p59
        %s238 = sand.u32 %s77, 1
        %s239 = scalar_lea.sflag [#allocation6], %s238
        %s240 = sand.u32 %s77, 1
        %s241 = smul.addr %s240, 2
        %s242 = scalar_lea.vmem [#allocation5], %s241
        %p243 = pneg %p90
        %p244 = pneg %p87
        %p245 = pneg %p118
        %p246 = pneg %p115
        %s247 = sand.u32 %s105, 1
        %s248 = scalar_lea.sflag [#allocation4], %s247
        %s249 = sand.u32 %s105, 1
        %s250 = smul.addr %s249, 2
        %s251 = scalar_lea.vmem [#allocation7], %s250
        %p252 = pneg %p146
        %p253 = pneg %p143
        %s254 = sand.u32 %s133, 1
        %s255 = scalar_lea.sflag [#allocation9], %s254
        %s256 = sand.u32 %s133, 1
        %s257 = smul.addr %s256, 12
        %s258 = scalar_lea.vmem [#allocation8], %s257
        %v259 = vld [vmem:[%s217] sm:$0x3]
        %v260 = vld [vmem:[%s217 + $0x2] sm:$0x3]
        %v261 = vld [vmem:[%s217 + $0x4] sm:$0x3]
        %v262 = vld [vmem:[%s217 + $0x6] sm:$0x3]
        %v263 = vld [vmem:[%s226] sm:$0x3]
        %vm264 = vcmask 1041408
        %v265 = vsel %vm264, %v259, -inf
        %v266 = vsel %vm264, %v260, -inf
        %v267 = vsel %vm264, %v261, -inf
        %v268 = vsel %vm264, %v262, -inf
        %v269 = vmax.f32 %v265, %v266
        %v270 = vmax.f32 %v267, %v268
        %v271 = vmax.f32 %v269, %v270
        %v272 = vsub.f32 %v259, %v271
        %v273 = vsub.f32 %v260, %v271
        %v274 = vsub.f32 %v261, %v271
        %v275 = vsub.f32 %v262, %v271
        %v276 = vmul.f32 %v272, 1.442695
        %v277 = vpow.pop %v276
        %v278 = vmul.f32 %v273, 1.442695
        %v279 = vpow.pop %v278
        %v280 = vmul.f32 %v274, 1.442695
        %v281 = vpow.pop %v280
        %v282 = vmul.f32 %v275, 1.442695
        %v283 = vpow.pop %v282
        %v284 = vsel %vm264, %v277, 0.0
        %v285 = vsel %vm264, %v279, 0.0
        %v286 = vadd.f32 %v284, %v285
        %v287 = vsel %vm264, %v281, 0.0
        %v288 = vadd.f32 %v286, %v287
        %v289 = vsel %vm264, %v283, 0.0
        %v290 = vadd.f32 %v288, %v289
        %v291 = vlog2.pop %v290
        %v292 = vmul.f32 %v291, 0.6931472
        %v293 = vadd.f32 %v292, %v271
        %v294 = vrcp.pop %v290
        %v295 = vmul.f32 %v277, %v294
        %v296 = vmul.f32 %v279, %v294
        %v297 = vmul.f32 %v281, %v294
        %v298 = vmul.f32 %v283, %v294
        %vm299 = vcmp.eq.s32.totalorder %v263, 0
        %vm300 = vcmp.eq.s32.totalorder %v263, 1
        %vm301 = vcmp.eq.s32.totalorder %v263, 2
        %vm302 = vcmp.eq.s32.totalorder %v263, 3
        %v303 = vsel %vm299, %v259, 0.0
        %v304 = vsel %vm300, %v260, 0.0
        %v305 = vsel %vm301, %v261, 0.0
        %v306 = vsel %vm302, %v262, 0.0
        %v307 = vsel %vm264, %v303, 0.0
        %v308 = vsel %vm264, %v304, 0.0
        %v309 = vadd.f32 %v307, %v308
        %v310 = vsel %vm264, %v305, 0.0
        %v311 = vadd.f32 %v309, %v310
        %v312 = vsel %vm264, %v306, 0.0
        %v313 = vadd.f32 %v311, %v312
        %v314 = vsub.f32 %v293, %v313
        %315 = vst [vmem:[%s251] sm:$0x3] %v314
        %v316 = vsel %vm299, %v295, 0.0
        %v317 = vsel %vm300, %v296, 0.0
        %v318 = vsel %vm301, %v297, 0.0
        %v319 = vsel %vm302, %v298, 0.0
        %v320 = vadd.f32 %v316, 0.0
        %v321 = vadd.f32 %v317, 0.0
        %v322 = vadd.f32 %v318, 0.0
        %v323 = vadd.f32 %v319, 0.0
        %v324 = vadd.f32 %v295, 0.0
        %v325 = vadd.f32 %v296, 0.0
        %v326 = vadd.f32 %v297, 0.0
        %v327 = vadd.f32 %v298, 0.0
        %v328 = vsel %vm299, 1, 0
        %v329 = vsel %vm300, 1, 0
        %v330 = vsel %vm301, 1, 0
        %v331 = vsel %vm302, 1, 0
        %v332 = vcvt.s32.f32 %v328
        %v333 = vcvt.s32.f32 %v329
        %v334 = vcvt.s32.f32 %v330
        %v335 = vcvt.s32.f32 %v331
        %v336 = vadd.f32 %v332, 0.0
        %v337 = vadd.f32 %v333, 0.0
        %v338 = vadd.f32 %v334, 0.0
        %v339 = vadd.f32 %v335, 0.0
        %v340 = vsel %vm264, %v320, 0.0
        %v341 = vrot.slane %v340, 4
        %v342 = vadd.f32 %v340, %v341
        %v343 = vrot.slane %v342, 2
        %v344 = vadd.f32 %v342, %v343
        %v345 = vrot.slane %v344, 1
        %v346 = vadd.f32 %v344, %v345
        %v347 = vsel %vm264, %v321, 0.0
        %v348 = vrot.slane %v347, 4
        %v349 = vadd.f32 %v347, %v348
        %v350 = vrot.slane %v349, 2
        %v351 = vadd.f32 %v349, %v350
        %v352 = vrot.slane %v351, 1
        %v353 = vadd.f32 %v351, %v352
        %v354 = vsel %vm264, %v322, 0.0
        %v355 = vrot.slane %v354, 4
        %v356 = vadd.f32 %v354, %v355
        %v357 = vrot.slane %v356, 2
        %v358 = vadd.f32 %v356, %v357
        %v359 = vrot.slane %v358, 1
        %v360 = vadd.f32 %v358, %v359
        %v361 = vsel %vm264, %v323, 0.0
        %v362 = vrot.slane %v361, 4
        %v363 = vadd.f32 %v361, %v362
        %v364 = vrot.slane %v363, 2
        %v365 = vadd.f32 %v363, %v364
        %v366 = vrot.slane %v365, 1
        %v367 = vadd.f32 %v365, %v366
        %v368 = vadd.f32 %v346, 0.0
        %v369 = vadd.f32 %v353, 0.0
        %v370 = vadd.f32 %v360, 0.0
        %v371 = vadd.f32 %v367, 0.0
        %v372 = vsel %vm264, %v324, 0.0
        %v373 = vrot.slane %v372, 4
        %v374 = vadd.f32 %v372, %v373
        %v375 = vrot.slane %v374, 2
        %v376 = vadd.f32 %v374, %v375
        %v377 = vrot.slane %v376, 1
        %v378 = vadd.f32 %v376, %v377
        %v379 = vsel %vm264, %v325, 0.0
        %v380 = vrot.slane %v379, 4
        %v381 = vadd.f32 %v379, %v380
        %v382 = vrot.slane %v381, 2
        %v383 = vadd.f32 %v381, %v382
        %v384 = vrot.slane %v383, 1
        %v385 = vadd.f32 %v383, %v384
        %v386 = vsel %vm264, %v326, 0.0
        %v387 = vrot.slane %v386, 4
        %v388 = vadd.f32 %v386, %v387
        %v389 = vrot.slane %v388, 2
        %v390 = vadd.f32 %v388, %v389
        %v391 = vrot.slane %v390, 1
        %v392 = vadd.f32 %v390, %v391
        %v393 = vsel %vm264, %v327, 0.0
        %v394 = vrot.slane %v393, 4
        %v395 = vadd.f32 %v393, %v394
        %v396 = vrot.slane %v395, 2
        %v397 = vadd.f32 %v395, %v396
        %v398 = vrot.slane %v397, 1
        %v399 = vadd.f32 %v397, %v398
        %v400 = vadd.f32 %v378, 0.0
        %v401 = vadd.f32 %v385, 0.0
        %v402 = vadd.f32 %v392, 0.0
        %v403 = vadd.f32 %v399, 0.0
        %v404 = vsel %vm264, %v336, 0.0
        %v405 = vrot.slane %v404, 4
        %v406 = vadd.f32 %v404, %v405
        %v407 = vrot.slane %v406, 2
        %v408 = vadd.f32 %v406, %v407
        %v409 = vrot.slane %v408, 1
        %v410 = vadd.f32 %v408, %v409
        %v411 = vsel %vm264, %v337, 0.0
        %v412 = vrot.slane %v411, 4
        %v413 = vadd.f32 %v411, %v412
        %v414 = vrot.slane %v413, 2
        %v415 = vadd.f32 %v413, %v414
        %v416 = vrot.slane %v415, 1
        %v417 = vadd.f32 %v415, %v416
        %v418 = vsel %vm264, %v338, 0.0
        %v419 = vrot.slane %v418, 4
        %v420 = vadd.f32 %v418, %v419
        %v421 = vrot.slane %v420, 2
        %v422 = vadd.f32 %v420, %v421
        %v423 = vrot.slane %v422, 1
        %v424 = vadd.f32 %v422, %v423
        %v425 = vsel %vm264, %v339, 0.0
        %v426 = vrot.slane %v425, 4
        %v427 = vadd.f32 %v425, %v426
        %v428 = vrot.slane %v427, 2
        %v429 = vadd.f32 %v427, %v428
        %v430 = vrot.slane %v429, 1
        %v431 = vadd.f32 %v429, %v430
        %v432 = vadd.f32 %v410, 0.0
        %v433 = vadd.f32 %v417, 0.0
        %v434 = vadd.f32 %v424, 0.0
        %v435 = vadd.f32 %v431, 0.0
        %vm440 = vcmask 1041409
        %v441 = vsel %vm440, %v369, %v368
        %vm442 = vcmask 1042434
        %v443 = vsel %vm442, %v370, %v441
        %vm444 = vcmask 1043459
        %v445 = vsel %vm444, %v371, %v443
        %447 = vst [vmem:[%s258] sm:$0xf] %v445
        %v452 = vsel %vm440, %v401, %v400
        %v453 = vsel %vm442, %v402, %v452
        %v454 = vsel %vm444, %v403, %v453
        %s456 = scalar_lea.vmem %s258, 4 [#allocation8]
        %457 = vst [vmem:[%s456] sm:$0xf] %v454
        %v462 = vsel %vm440, %v433, %v432
        %v463 = vsel %vm442, %v434, %v462
        %v464 = vsel %vm444, %v435, %v463
        %s466 = scalar_lea.vmem %s258, 8 [#allocation8]
        %467 = vst [vmem:[%s466] sm:$0xf] %v464
        %s468 = sand.u32 %s105, 1
        %s469 = scalar_lea.sflag [#allocation4], %s468
        %s470 = sand.u32 %s105, 1
        %s471 = smul.addr %s470, 2
        %s472 = scalar_lea.vmem [#allocation7], %s471
        %s473 = sand.u32 %s133, 1
        %s474 = scalar_lea.sflag [#allocation9], %s473
        %s475 = sand.u32 %s133, 1
        %s476 = smul.addr %s475, 12
        %s477 = scalar_lea.vmem [#allocation8], %s476
        // Predicated region
        $region37: #{tpu_custom_call.1} parent=27 // pred_check
          %p478 = pneg %p115
        $region38: #{tpu_custom_call.1} parent=27 // pred_check_branch
          %480 = sbr.rel (%p478) target = $region40
        $region39: #{tpu_custom_call.1} parent=27 // pred_region
          %s482 = ssub.s32 32, 32
          %483 = vsyncadd %s469, %s482
          %s484 = sadd.s32 %s32, %s31
          %s485 = smul.addr %s484, 32
          %s486 = scalar_lea.hbm %s2, %s485
          %s488 = sshll.u32 %s472, 4
          %s489 = int_to_ptr.vmem [resolvable:$true] %s488
          %491 = dma.vmem_to_hbm [thread:$0]  %s489, 32, %s486, %s469
        $region40: #{tpu_custom_call.1} parent=27 // pred_fallthru
          _
        // Predicated region
        $region41: #{tpu_custom_call.1} parent=27 // pred_check
          %p492 = pneg %p143
        $region42: #{tpu_custom_call.1} parent=27 // pred_check_branch
          %494 = sbr.rel (%p492) target = $region44
        $region43: #{tpu_custom_call.1} parent=27 // pred_region
          %s496 = ssub.s32 192, 192
          %497 = vsyncadd %s474, %s496
          %s498 = smul.addr %s32, 3
          %s499 = smul.addr %s31, 3
          %s500 = sadd.s32 %s498, %s499
          %s501 = smul.addr %s500, 64
          %s502 = scalar_lea.hbm %s3, %s501
          %s503 = sshll.u32 %s477, 4
          %s504 = int_to_ptr.vmem [resolvable:$true] %s503
          %509 = dma.vmem_to_hbm [thread:$0]  %s504, 192, %s502, %s474, 64, 64, 4
        $region44: #{tpu_custom_call.1} parent=27 // pred_fallthru
          _
      $region28: #{tpu_custom_call.1} parent=5 // pred_fallthru
        _
      %p510 = scmp.le.s32.totalorder 2, %s22
      // Predicated region
      $region45: #{tpu_custom_call.1} parent=5 // pred_check
        %p511 = pneg %p510
      $region46: #{tpu_custom_call.1} parent=5 // pred_check_branch
        %513 = sbr.rel (%p511) target = $region48
      $region47: #{tpu_custom_call.1} parent=5 // pred_region
        %s514 = ssub.s32 %s22, 2
        // Predicated region
        $region49: #{tpu_custom_call.1} parent=47 // pred_check
          %p515 = pneg %p121
        $region50: #{tpu_custom_call.1} parent=47 // pred_check_branch
          %517 = sbr.rel (%p515) target = $region52
        $region51: #{tpu_custom_call.1} parent=47 // pred_region
          %s518 = sand.u32 %s106, 1
          %s519 = scalar_lea.sflag [#allocation4], %s518
          %s520 = sand.u32 %s106, 1
          %s521 = smul.addr %s520, 2
          %s522 = scalar_lea.vmem [#allocation7], %s521
          %523 = dma.done %s519, 32
        $region52: #{tpu_custom_call.1} parent=47 // pred_fallthru
          _
        // Predicated region
        $region53: #{tpu_custom_call.1} parent=47 // pred_check
          %p524 = pneg %p149
        $region54: #{tpu_custom_call.1} parent=47 // pred_check_branch
          %526 = sbr.rel (%p524) target = $region56
        $region55: #{tpu_custom_call.1} parent=47 // pred_region
          %s527 = sand.u32 %s134, 1
          %s528 = scalar_lea.sflag [#allocation9], %s527
          %s529 = sand.u32 %s134, 1
          %s530 = smul.addr %s529, 12
          %s531 = scalar_lea.vmem [#allocation8], %s530
          %532 = dma.done %s528, 192
        $region56: #{tpu_custom_call.1} parent=47 // pred_fallthru
          _
      $region48: #{tpu_custom_call.1} parent=5 // pred_fallthru
        _
    $region6: #{tpu_custom_call.1} parent=1 // loop_footer
      %s26 = sadd.s32 1, %s22
    $region7: #{tpu_custom_call.1} parent=1 // loop_footer_branch
      %21 = sbr.rel target = $region3
    $region8: #{tpu_custom_call.1} parent=1 // loop_exit
      _
    %533 = vsyncpa [#allocation3], 1
    %s534 = scalar_lea.sflag [#allocation3], 1
    %535 = vsyncpa %s534, 1
    %536 = vsyncpa [#allocation6], 1
    %s537 = scalar_lea.sflag [#allocation6], 1
    %538 = vsyncpa %s537, 1
    %539 = vsyncpa [#allocation4], 1
    %s540 = scalar_lea.sflag [#allocation4], 1
    %541 = vsyncpa %s540, 1
    %542 = vsyncpa [#allocation9], 1
    %s543 = scalar_lea.sflag [#allocation9], 1
    %544 = vsyncpa %s543, 1

</llo_original>
